<compile_context>
chip_gen: v6e
topology: v6e:2x2x1
jax: 0.10.0
libtpu: 0.0.40
codegen_flags: <defaults>
</compile_context>

<pallas_src>
import functools

import jax
import jax.numpy as jnp
from jax import lax
from jax.experimental import pallas as pl
from jax.experimental.pallas import tpu as pltpu


def _conv_mm_kernel(*refs, act, has_bias, b_blk):
    """refs = (w_ref, x_ref, [bias_ref], [alpha_ref], o_ref).

    w_ref:     (C_out, K)            K = C_in*KH*KW, native dtype
    x_ref:     (b_blk, K, P_blk)     im2col patches, native dtype
    bias_ref:  (C_out, 1)            optional
    alpha_ref: (C_out, 1)            optional (PReLU per-channel slope)
    o_ref:     (b_blk, C_out, P_blk)
    """
    refs = list(refs)
    o_ref = refs.pop()
    w_ref = refs.pop(0)
    x_ref = refs.pop(0)
    bias_ref = refs.pop(0) if has_bias else None
    alpha_ref = refs.pop(0) if act == "PReLU" else None

    w = w_ref[...]                    # stays resident across the small b loop
    for b in range(b_blk):            # short static loop, one MXU pass per image
        acc = jnp.dot(w, x_ref[b], preferred_element_type=jnp.float32)
        if bias_ref is not None:
            acc = acc + bias_ref[...].astype(jnp.float32)       # (C_out,1) bcast
        if act == "ReLU":
            acc = jnp.maximum(acc, 0.0)
        elif act == "LeakyReLU":
            acc = jnp.where(acc > 0, acc, 0.05 * acc)            # module uses 0.05
        elif act == "PReLU":
            alpha = alpha_ref[...].astype(jnp.float32)           # per-channel
            acc = jnp.where(acc > 0, acc, alpha * acc)
        o_ref[b] = acc.astype(o_ref.dtype)


def _largest_divisor_leq(n, cap):
    for d in range(min(n, cap), 0, -1):
        if n % d == 0:
            return d
    return 1


def _pick_spatial_block(p, max_elems=2048):
    """Largest 128-multiple divisor of p that is <= max_elems, else full p."""
    if p <= max_elems:
        return p
    cand = max_elems - max_elems % 128
    while cand >= 128:
        if p % cand == 0:
            return cand
        cand -= 128
    return p


def conv2d(x, weight, bias=None, *, stride=1, padding=0, groups=1,
           act=None, prelu_weight=None):
    """Pallas implementation of Conv2d.forward (NCHW, like the torch module)."""
    if groups != 1:
        # TODO(synk): grouped convolution not implemented (module default is 1).
        raise NotImplementedError("groups > 1 not supported")
    if act not in (None, "ReLU", "LeakyReLU", "PReLU"):
        raise ValueError(act)

    B, C_in, H, W = x.shape
    C_out, C_in_w, KH, KW = weight.shape
    assert C_in_w == C_in
    sh = sw = int(stride)
    ph = pw = int(padding)

    H_out = (H + 2 * ph - KH) // sh + 1
    W_out = (W + 2 * pw - KW) // sw + 1
    P = H_out * W_out
    K_dim = C_in * KH * KW

    # im2col patch extraction (padding folded in -> no separate jnp.pad pass).
    # The patch-feature axis is ordered (C_in, KH, KW) row-major, which matches
    # weight.reshape(C_out, C_in*KH*KW) from OIHW layout.
    patches = lax.conv_general_dilated_patches(
        x, filter_shape=(KH, KW), window_strides=(sh, sw),
        padding=((ph, ph), (pw, pw)),
        dimension_numbers=("NCHW", "OIHW", "NCHW"))
    patches = patches.reshape(B, K_dim, P)            # free row-major reshape
    w2d = weight.reshape(C_out, K_dim)                # free row-major reshape

    b_blk = _largest_divisor_leq(B, 8)                # whole batch for small B
    p_blk = _pick_spatial_block(P)
    grid = (B // b_blk, P // p_blk)

    inputs = [w2d, patches]
    in_specs = [
        pl.BlockSpec((C_out, K_dim), lambda i, j: (0, 0)),
        pl.BlockSpec((b_blk, K_dim, p_blk), lambda i, j: (i, 0, j)),
    ]
    has_bias = bias is not None
    if has_bias:
        inputs.append(bias.reshape(C_out, 1))
        in_specs.append(pl.BlockSpec((C_out, 1), lambda i, j: (0, 0)))
    if act == "PReLU":
        assert prelu_weight is not None
        inputs.append(prelu_weight.reshape(C_out, 1))
        in_specs.append(pl.BlockSpec((C_out, 1), lambda i, j: (0, 0)))

    itemsize = jnp.dtype(x.dtype).itemsize
    cost = pl.CostEstimate(
        flops=2 * B * C_out * K_dim * P,
        transcendentals=0,
        bytes_accessed=(patches.size + w2d.size + B * C_out * P) * itemsize,
    )

    # VMEM budget: double-buffered patch + output blocks, one weight tile,
    # bias/alpha tiles; capped at 48 MiB (safe inside v7x's 64 MiB physical).
    block_bytes = (
        2 * b_blk * K_dim * p_blk * itemsize
        + 2 * b_blk * C_out * p_blk * itemsize
        + C_out * max(K_dim, 128) * itemsize
        + 2 * C_out * 128 * 4)
    vmem_limit = int(min(max(4 * block_bytes, 16 * 2 ** 20), 48 * 2 ** 20))

    out_flat = pl.pallas_call(
        functools.partial(_conv_mm_kernel, act=act, has_bias=has_bias,
                          b_blk=b_blk),
        grid=grid,
        in_specs=in_specs,
        out_specs=pl.BlockSpec((b_blk, C_out, p_blk), lambda i, j: (i, 0, j)),
        out_shape=jax.ShapeDtypeStruct((B, C_out, P), x.dtype),
        compiler_params=pltpu.CompilerParams(
            dimension_semantics=("parallel", "parallel"),
            vmem_limit_bytes=vmem_limit,
        ),
        cost_estimate=cost,
    )(*inputs)

    return out_flat.reshape(B, C_out, H_out, W_out)


def _reference(x, w, b, stride, padding, act, alpha):
    out = lax.conv_general_dilated(
        x, w,
        window_strides=(stride, stride),
        padding=((padding, padding), (padding, padding)),
        dimension_numbers=("NCHW", "OIHW", "NCHW"))
    if b is not None:
        out = out + b[None, :, None, None]
    if act == "ReLU":
        out = jnp.maximum(out, 0.0)
    elif act == "LeakyReLU":
        out = jnp.where(out > 0, out, 0.05 * out)
    elif act == "PReLU":
        out = jnp.where(out > 0, out, alpha[None, :, None, None] * out)
    return out


if __name__ == "__main__":
    B, C_in, C_out, H, W, K = 2, 4, 8, 16, 16, 3
    key = jax.random.PRNGKey(0)
    k1, k2, k3, k4 = jax.random.split(key, 4)
    x = jax.random.normal(k1, (B, C_in, H, W), dtype=jnp.float32)
    w = jax.random.normal(k2, (C_out, C_in, K, K), dtype=jnp.float32) * 0.1
    b = jax.random.normal(k3, (C_out,), dtype=jnp.float32) * 0.1
    alpha = jax.random.uniform(k4, (C_out,), jnp.float32, 0.05, 0.3)

    # conv + bias + ReLU (SAME: k=3, s=1, p=1)
    out_relu = jax.block_until_ready(
        conv2d(x, w, b, stride=1, padding=1, act="ReLU"))
    ref_relu = _reference(x, w, b, 1, 1, "ReLU", None)
    assert out_relu.shape == (B, C_out, H, W)
    assert jnp.allclose(out_relu, ref_relu, atol=2e-2, rtol=2e-2)

    # conv (no bias) + PReLU (per-channel slope)
    out_prelu = jax.block_until_ready(
        conv2d(x, w, None, stride=1, padding=1, act="PReLU", prelu_weight=alpha))
    ref_prelu = _reference(x, w, None, 1, 1, "PReLU", alpha)
    assert jnp.allclose(out_prelu, ref_prelu, atol=2e-2, rtol=2e-2)

    # conv + bias + LeakyReLU(0.05)
    out_lrelu = jax.block_until_ready(
        conv2d(x, w, b, stride=1, padding=1, act="LeakyReLU"))
    ref_lrelu = _reference(x, w, b, 1, 1, "LeakyReLU", None)
    assert jnp.allclose(out_lrelu, ref_lrelu, atol=2e-2, rtol=2e-2)

    # conv only, no activation, no bias, no padding
    out_plain = jax.block_until_ready(conv2d(x, w, None, stride=1, padding=0))
    ref_plain = _reference(x, w, None, 1, 0, None, None)
    assert out_plain.shape == (B, C_out, H - 2, W - 2)
    assert jnp.allclose(out_plain, ref_plain, atol=2e-2, rtol=2e-2)

    # strided conv + bias + ReLU (k=3, s=2, p=1)
    out_s2 = jax.block_until_ready(
        conv2d(x, w, b, stride=2, padding=1, act="ReLU"))
    ref_s2 = _reference(x, w, b, 2, 1, "ReLU", None)
    assert out_s2.shape == (B, C_out, H // 2, W // 2)
    assert jnp.allclose(out_s2, ref_s2, atol=2e-2, rtol=2e-2)

    print("KERNEL_OK")
</pallas_src>

<mosaic_0001>
module attributes {stable_mosaic.version = 11 : i64} {
  func.func @_conv_mm_kernel(%arg0: i32, %arg1: i32, %arg2: memref<8x36xf32, #tpu.memory_space<vmem>>, %arg3: memref<2x36x256xf32, #tpu.memory_space<vmem>>, %arg4: memref<8x1xf32, #tpu.memory_space<vmem>>, %arg5: memref<2x8x256xf32, #tpu.memory_space<vmem>>) attributes {dimension_semantics = [#tpu.dimension_semantics<parallel>, #tpu.dimension_semantics<parallel>], iteration_bounds = array<i64: 1, 1>, scalar_prefetch = 0 : i64, scratch_operands = 0 : i64, tpu.core_type = #tpu.core_type<tc>, window_params = [{pipeline_mode = #tpu.pipeline_mode<synchronous>, transform_indices = @transform_0, window_bounds = array<i64: 8, 36>}, {transform_indices = @transform_1, window_bounds = array<i64: 2, 36, 256>}, {pipeline_mode = #tpu.pipeline_mode<synchronous>, transform_indices = @transform_2, window_bounds = array<i64: 8, 1>}, {transform_indices = @transform_3, window_bounds = array<i64: 2, 8, 256>}]} {
    %c0 = arith.constant 0 : index
    %c0_0 = arith.constant 0 : index
    %0 = vector.load %arg2[%c0, %c0_0] : memref<8x36xf32, #tpu.memory_space<vmem>>, vector<8x36xf32>
    %c0_1 = arith.constant 0 : index
    %c0_2 = arith.constant 0 : index
    %c0_3 = arith.constant 0 : index
    %1 = vector.load %arg3[%c0_1, %c0_2, %c0_3] : memref<2x36x256xf32, #tpu.memory_space<vmem>>, vector<1x36x256xf32>
    %2 = vector.shape_cast %1 : vector<1x36x256xf32> to vector<36x256xf32>
    %cst = arith.constant dense<0.000000e+00> : vector<8x256xf32>
    %3 = tpu.matmul %0, %2, %cst {dimension_numbers = #tpu.dot_dimension_numbers<[1], [0], [0], [1], [0, 0, 1, 1], [], []>} : vector<8x36xf32>, vector<36x256xf32>, vector<8x256xf32> -> vector<8x256xf32>
    %c0_4 = arith.constant 0 : index
    %c0_5 = arith.constant 0 : index
    %4 = vector.load %arg4[%c0_4, %c0_5] : memref<8x1xf32, #tpu.memory_space<vmem>>, vector<8x1xf32>
    %5 = vector.broadcast %4 : vector<8x1xf32> to vector<8x256xf32>
    %6 = arith.addf %3, %5 : vector<8x256xf32>
    %cst_6 = arith.constant 0.000000e+00 : f32
    %7 = vector.broadcast %cst_6 : f32 to vector<8x256xf32>
    %8 = arith.maximumf %6, %7 : vector<8x256xf32>
    %c0_7 = arith.constant 0 : index
    %c0_8 = arith.constant 0 : index
    %c0_9 = arith.constant 0 : index
    %9 = vector.load %arg5[%c0_7, %c0_8, %c0_9] : memref<2x8x256xf32, #tpu.memory_space<vmem>>, vector<1x8x256xf32>
    %10 = vector.shape_cast %9 : vector<1x8x256xf32> to vector<8x256xf32>
    %11 = vector.shape_cast %8 : vector<8x256xf32> to vector<1x8x256xf32>
    tpu.vector_store %arg5[%c0_7, %c0_8, %c0_9], %11 {strides = array<i32>} : memref<2x8x256xf32, #tpu.memory_space<vmem>>, vector<1x8x256xf32>,
    %c1 = arith.constant 1 : index
    %c0_10 = arith.constant 0 : index
    %c0_11 = arith.constant 0 : index
    %12 = vector.load %arg3[%c1, %c0_10, %c0_11] : memref<2x36x256xf32, #tpu.memory_space<vmem>>, vector<1x36x256xf32>
    %13 = vector.shape_cast %12 : vector<1x36x256xf32> to vector<36x256xf32>
    %cst_12 = arith.constant dense<0.000000e+00> : vector<8x256xf32>
    %14 = tpu.matmul %0, %13, %cst_12 {dimension_numbers = #tpu.dot_dimension_numbers<[1], [0], [0], [1], [0, 0, 1, 1], [], []>} : vector<8x36xf32>, vector<36x256xf32>, vector<8x256xf32> -> vector<8x256xf32>
    %c0_13 = arith.constant 0 : index
    %c0_14 = arith.constant 0 : index
    %15 = vector.load %arg4[%c0_13, %c0_14] : memref<8x1xf32, #tpu.memory_space<vmem>>, vector<8x1xf32>
    %16 = vector.broadcast %15 : vector<8x1xf32> to vector<8x256xf32>
    %17 = arith.addf %14, %16 : vector<8x256xf32>
    %cst_15 = arith.constant 0.000000e+00 : f32
    %18 = vector.broadcast %cst_15 : f32 to vector<8x256xf32>
    %19 = arith.maximumf %17, %18 : vector<8x256xf32>
    %c1_16 = arith.constant 1 : index
    %c0_17 = arith.constant 0 : index
    %c0_18 = arith.constant 0 : index
    %20 = vector.load %arg5[%c1_16, %c0_17, %c0_18] : memref<2x8x256xf32, #tpu.memory_space<vmem>>, vector<1x8x256xf32>
    %21 = vector.shape_cast %20 : vector<1x8x256xf32> to vector<8x256xf32>
    %22 = vector.shape_cast %19 : vector<8x256xf32> to vector<1x8x256xf32>
    tpu.vector_store %arg5[%c1_16, %c0_17, %c0_18], %22 {strides = array<i32>} : memref<2x8x256xf32, #tpu.memory_space<vmem>>, vector<1x8x256xf32>,
    return
  }
  func.func @transform_0(%arg0: i32, %arg1: i32) -> (i32, i32) {
    %c0_i32 = arith.constant 0 : i32
    %c0_i32_0 = arith.constant 0 : i32
    %c0_i32_1 = arith.constant 0 : i32
    return %c0_i32, %c0_i32_0 : i32, i32
  }
  func.func @transform_1(%arg0: i32, %arg1: i32) -> (i32, i32, i32) {
    %c0_i32 = arith.constant 0 : i32
    %c0_i32_0 = arith.constant 0 : i32
    return %arg0, %c0_i32, %arg1 : i32, i32, i32
  }
  func.func @transform_2(%arg0: i32, %arg1: i32) -> (i32, i32) {
    %c0_i32 = arith.constant 0 : i32
    %c0_i32_0 = arith.constant 0 : i32
    %c0_i32_1 = arith.constant 0 : i32
    return %c0_i32, %c0_i32_0 : i32, i32
  }
  func.func @transform_3(%arg0: i32, %arg1: i32) -> (i32, i32, i32) {
    %c0_i32 = arith.constant 0 : i32
    %c0_i32_0 = arith.constant 0 : i32
    return %arg0, %c0_i32, %arg1 : i32, i32, i32
  }
}

</mosaic_0001>

<llo_original>
// kernel: tpu_custom_call.1
$region0: #{tpu_custom_call.1}
  #allocation0 [shape = 'u32[]', space=smem, size = 0x4, offset = 0x4, fixed_abs, tag = 'smem constant byte address 0x4 - core index']
  #allocation1 [shape = 'u32[144,128]{1,0:T(1,128)}', space=vmem, size = 0x12000, scoped, tag = 'internal scratch']
  %s0 = inlined_call_operand.vmem [shape: f32[8,36], index: 0, kind: input, shape index: {}]
  %s1 = inlined_call_operand.vmem [shape: f32[2,36,256], index: 1, kind: input, shape index: {}]
  %s2 = inlined_call_operand.vmem [shape: f32[8,1], index: 2, kind: input, shape index: {}]
  %s3 = inlined_call_operand.hbm [shape: f32[2,8,256], index: 3, kind: output, shape index: {}]
  %s4 = sld [smem:[#allocation0]]
  $region22: #{tpu_custom_call.1} parent=0
    _
  %s6 = ssub.s32 1, %s4
  %s7 = scalar_select 0, %s6, %s4
  $region1: #{tpu_custom_call.1} parent=0
    #allocation2 [shape = 'u8[16384]{0}', space=vmem, size = 0x4000, scoped, tag = 'output window, operand 0, single buffered']
    #allocation3 [shape = 's32[1]{0}', space=sflag, size = 0x4, scoped, tag = 'scoped memory for tpu_custom_call.1']
    %8 = vsyncpa [#allocation3], 0
    // Predicated region
    $region2: #{tpu_custom_call.1} parent=1 // pred_check
      _
    $region3: #{tpu_custom_call.1} parent=1 // pred_check_branch
      %10 = sbr.rel (0) target = $region5
    $region4: #{tpu_custom_call.1} parent=1 // pred_region
      _
    $region5: #{tpu_custom_call.1} parent=1 // pred_fallthru
      _
    // Predicated region
    $region6: #{tpu_custom_call.1} parent=1 // pred_check
      _
    $region7: #{tpu_custom_call.1} parent=1 // pred_check_branch
      %12 = sbr.rel (0) target = $region9
    $region8: #{tpu_custom_call.1} parent=1 // pred_region
      _
    $region9: #{tpu_custom_call.1} parent=1 // pred_fallthru
      _
    // Predicated region
    $region10: #{tpu_custom_call.1} parent=1 // pred_check
      _
    $region11: #{tpu_custom_call.1} parent=1 // pred_check_branch
      %14 = sbr.rel (0) target = $region13
    $region12: #{tpu_custom_call.1} parent=1 // pred_region
      _
    $region13: #{tpu_custom_call.1} parent=1 // pred_fallthru
      _
    %v15 = vld [vmem:[%s0] sm:$0xff]
    %v16 = vld [vmem:[%s1] sm:$0xff]
    %v17 = vld [vmem:[%s1 + $0x8] sm:$0xff]
    %v18 = vld [vmem:[%s1 + $0x10] sm:$0xff]
    %v19 = vld [vmem:[%s1 + $0x18] sm:$0xff]
    %v20 = vld [vmem:[%s1 + $0x20] sm:$0xff]
    %v21 = vld [vmem:[%s1 + $0x28] sm:$0xff]
    %v22 = vld [vmem:[%s1 + $0x30] sm:$0xff]
    %v23 = vld [vmem:[%s1 + $0x38] sm:$0xff]
    %v24 = vld [vmem:[%s1 + $0x40] sm:$0xf]
    %v25 = vld [vmem:[%s1 + $0x48] sm:$0xf]
    %v26 = vld [vmem:[%s2] sm:$0xff]
    %28 = vset.pattern.permute.xlu0 0
    %29 = vperm.xlu0 %28, %v26
    %v30 = vpop.permute.xlu0 %29
    %vm32 = vcmask 293888
    %v34 = vsel %vm32, %v15, 0
    %vm36 = vcmask 1043456
    %v38 = vsel %vm36, %v24, 0
    %v41 = vsel %vm36, %v25, 0
    %43 = vmatprep.subr.mxu0 0.0
    %44 = vmatpush1.msra.mxu0 0.0
    %45 = vmatprep.subr.mxu0 0.0
    %46 = vmatpush1.msra.mxu0 0.0
    %47 = vmatprep.subr.mxu0 0.0
    %48 = vmatpush1.msra.mxu0 0.0
    %49 = vmatprep.subr.mxu0 0.0
    %50 = vmatpush1.msra.mxu0 0.0
    %51 = vmatprep.subr.mxu0 0.0
    %52 = vmatpush1.msra.mxu0 0.0
    %53 = vmatprep.subr.mxu0 0.0
    %54 = vmatpush1.msra.mxu0 0.0
    %55 = vmatprep.subr.mxu0 0.0
    %56 = vmatpush1.msra.mxu0 0.0
    %57 = vmatprep.subr.mxu0 0.0
    %58 = vmatpush1.msra.mxu0 0.0
    %59 = vmatprep.subr.mxu0 0.0
    %60 = vmatpush1.msra.mxu0 0.0
    %61 = vmatprep.subr.mxu0 0.0
    %62 = vmatpush1.msra.mxu0 0.0
    %63 = vmatprep.subr.mxu0 0.0
    %64 = vmatpush1.msra.mxu0 0.0
    %65 = vmatprep.subr.mxu0 %v41
    %66 = vmatpush1.msra.mxu0 %v38
    %67 = vmatprep.subr.mxu0 %v23
    %68 = vmatpush1.msra.mxu0 %v22
    %69 = vmatprep.subr.mxu0 %v21
    %70 = vmatpush1.msra.mxu0 %v20
    %71 = vmatprep.subr.mxu0 %v19
    %72 = vmatpush1.msra.mxu0 %v18
    %73 = vmatprep.subr.mxu0 %v17
    %74 = vmatpush1.msra.mxu0 %v16
    %75 = vmatprep.subr.mxu0 0.0
    %76 = vmatpush2.msra.mxu0 0.0
    %77 = vmatprep.subr.mxu0 0.0
    %78 = vmatpush2.msra.mxu0 0.0
    %79 = vmatprep.subr.mxu0 0.0
    %80 = vmatpush2.msra.mxu0 0.0
    %81 = vmatprep.subr.mxu0 0.0
    %82 = vmatpush2.msra.mxu0 0.0
    %83 = vmatprep.subr.mxu0 0.0
    %84 = vmatpush2.msra.mxu0 0.0
    %85 = vmatprep.subr.mxu0 0.0
    %86 = vmatpush2.msra.mxu0 0.0
    %87 = vmatprep.subr.mxu0 0.0
    %88 = vmatpush2.msra.mxu0 0.0
    %89 = vmatprep.subr.mxu0 0.0
    %90 = vmatpush2.msra.mxu0 0.0
    %91 = vmatprep.subr.mxu0 0.0
    %92 = vmatpush2.msra.mxu0 0.0
    %93 = vmatprep.subr.mxu0 0.0
    %94 = vmatpush2.msra.mxu0 0.0
    %95 = vmatprep.subr.mxu0 0.0
    %96 = vmatpush2.msra.mxu0 0.0
    %97 = vmatprep.subr.mxu0 0.0
    %98 = vmatpush2.msra.mxu0 0.0
    %99 = vmatprep.subr.mxu0 0.0
    %100 = vmatpush2.msra.mxu0 0.0
    %101 = vmatprep.subr.mxu0 0.0
    %102 = vmatpush2.msra.mxu0 0.0
    %103 = vmatprep.subr.mxu0 0.0
    %104 = vmatpush2.msra.mxu0 0.0
    %105 = vmatprep.subr.mxu0 0.0
    %106 = vmatpush2.msra.mxu0 0.0
    %107 = vmatprep.mubr.f32.mxu0 0.0
    %108 = vmatmul.mubr.f32.gmra.mxu0 %v34
    %v109 = vpop.f32.mrf.mxu0
    %v110 = vadd.f32 %v30, %v109
    %v111 = vpop.f32.mrf.mxu0
    %v112 = vadd.f32 %v30, %v111
    %113 = vdwg.mxu0
    %v114 = vmax.f32 %v110, 0.0
    %v115 = vmax.f32 %v112, 0.0
    %116 = vst [vmem:[#allocation2] sm:$0xff] %v114
    %117 = vst [vmem:[#allocation2 + $0x8] sm:$0xff] %v115
    %s118 = scalar_lea.vmem %s1, 80
    %v119 = vld [vmem:[%s118] sm:$0xff]
    %v120 = vld [vmem:[%s118 + $0x8] sm:$0xff]
    %v121 = vld [vmem:[%s118 + $0x10] sm:$0xff]
    %v122 = vld [vmem:[%s118 + $0x18] sm:$0xff]
    %v123 = vld [vmem:[%s118 + $0x20] sm:$0xff]
    %v124 = vld [vmem:[%s118 + $0x28] sm:$0xff]
    %v125 = vld [vmem:[%s118 + $0x30] sm:$0xff]
    %v126 = vld [vmem:[%s118 + $0x38] sm:$0xff]
    %v127 = vld [vmem:[%s118 + $0x40] sm:$0xf]
    %v128 = vld [vmem:[%s118 + $0x48] sm:$0xf]
    %v129 = vld [vmem:[%s2] sm:$0xff]
    %131 = vset.pattern.permute.xlu0 0
    %132 = vperm.xlu0 %131, %v129
    %v133 = vpop.permute.xlu0 %132
    %v136 = vsel %vm36, %v127, 0
    %v139 = vsel %vm36, %v128, 0
    %141 = vmatprep.subr.mxu0 0.0
    %142 = vmatpush1.msra.mxu0 0.0
    %143 = vmatprep.subr.mxu0 0.0
    %144 = vmatpush1.msra.mxu0 0.0
    %145 = vmatprep.subr.mxu0 0.0
    %146 = vmatpush1.msra.mxu0 0.0
    %147 = vmatprep.subr.mxu0 0.0
    %148 = vmatpush1.msra.mxu0 0.0
    %149 = vmatprep.subr.mxu0 0.0
    %150 = vmatpush1.msra.mxu0 0.0
    %151 = vmatprep.subr.mxu0 0.0
    %152 = vmatpush1.msra.mxu0 0.0
    %153 = vmatprep.subr.mxu0 0.0
    %154 = vmatpush1.msra.mxu0 0.0
    %155 = vmatprep.subr.mxu0 0.0
    %156 = vmatpush1.msra.mxu0 0.0
    %157 = vmatprep.subr.mxu0 0.0
    %158 = vmatpush1.msra.mxu0 0.0
    %159 = vmatprep.subr.mxu0 0.0
    %160 = vmatpush1.msra.mxu0 0.0
    %161 = vmatprep.subr.mxu0 0.0
    %162 = vmatpush1.msra.mxu0 0.0
    %163 = vmatprep.subr.mxu0 %v139
    %164 = vmatpush1.msra.mxu0 %v136
    %165 = vmatprep.subr.mxu0 %v126
    %166 = vmatpush1.msra.mxu0 %v125
    %167 = vmatprep.subr.mxu0 %v124
    %168 = vmatpush1.msra.mxu0 %v123
    %169 = vmatprep.subr.mxu0 %v122
    %170 = vmatpush1.msra.mxu0 %v121
    %171 = vmatprep.subr.mxu0 %v120
    %172 = vmatpush1.msra.mxu0 %v119
    %173 = vmatprep.subr.mxu0 0.0
    %174 = vmatpush2.msra.mxu0 0.0
    %175 = vmatprep.subr.mxu0 0.0
    %176 = vmatpush2.msra.mxu0 0.0
    %177 = vmatprep.subr.mxu0 0.0
    %178 = vmatpush2.msra.mxu0 0.0
    %179 = vmatprep.subr.mxu0 0.0
    %180 = vmatpush2.msra.mxu0 0.0
    %181 = vmatprep.subr.mxu0 0.0
    %182 = vmatpush2.msra.mxu0 0.0
    %183 = vmatprep.subr.mxu0 0.0
    %184 = vmatpush2.msra.mxu0 0.0
    %185 = vmatprep.subr.mxu0 0.0
    %186 = vmatpush2.msra.mxu0 0.0
    %187 = vmatprep.subr.mxu0 0.0
    %188 = vmatpush2.msra.mxu0 0.0
    %189 = vmatprep.subr.mxu0 0.0
    %190 = vmatpush2.msra.mxu0 0.0
    %191 = vmatprep.subr.mxu0 0.0
    %192 = vmatpush2.msra.mxu0 0.0
    %193 = vmatprep.subr.mxu0 0.0
    %194 = vmatpush2.msra.mxu0 0.0
    %195 = vmatprep.subr.mxu0 0.0
    %196 = vmatpush2.msra.mxu0 0.0
    %197 = vmatprep.subr.mxu0 0.0
    %198 = vmatpush2.msra.mxu0 0.0
    %199 = vmatprep.subr.mxu0 0.0
    %200 = vmatpush2.msra.mxu0 0.0
    %201 = vmatprep.subr.mxu0 0.0
    %202 = vmatpush2.msra.mxu0 0.0
    %203 = vmatprep.subr.mxu0 0.0
    %204 = vmatpush2.msra.mxu0 0.0
    %205 = vmatprep.mubr.f32.mxu0 0.0
    %206 = vmatmul.mubr.f32.gmra.mxu0 %v34
    %v207 = vpop.f32.mrf.mxu0
    %v208 = vadd.f32 %v133, %v207
    %v209 = vpop.f32.mrf.mxu0
    %v210 = vadd.f32 %v133, %v209
    %211 = vdwg.mxu0
    %v212 = vmax.f32 %v208, 0.0
    %v213 = vmax.f32 %v210, 0.0
    %s214 = scalar_lea.vmem [#allocation2], 16
    %215 = vst [vmem:[%s214] sm:$0xff] %v212
    %216 = vst [vmem:[%s214 + $0x8] sm:$0xff] %v213
    // Predicated region
    $region14: #{tpu_custom_call.1} parent=1 // pred_check
      _
    $region15: #{tpu_custom_call.1} parent=1 // pred_check_branch
      %218 = sbr.rel (0) target = $region17
    $region16: #{tpu_custom_call.1} parent=1 // pred_region
      %s220 = ssub.s32 512, 512
      %221 = vsyncadd [#allocation3], %s220
      %s222 = sshll.u32 [#allocation2], 4
      %s223 = int_to_ptr.vmem [resolvable:$true] %s222
      %228 = dma.vmem_to_hbm [thread:$0]  %s223, 512, %s3, [#allocation3], 256, 256, 16
    $region17: #{tpu_custom_call.1} parent=1 // pred_fallthru
      _
    // Predicated region
    $region18: #{tpu_custom_call.1} parent=1 // pred_check
      _
    $region19: #{tpu_custom_call.1} parent=1 // pred_check_branch
      %230 = sbr.rel (0) target = $region21
    $region20: #{tpu_custom_call.1} parent=1 // pred_region
      %231 = dma.done [#allocation3], 512
    $region21: #{tpu_custom_call.1} parent=1 // pred_fallthru
      _
    %232 = vsyncpa [#allocation3], 1

</llo_original>
